<compile_context>
chip_gen: v6e
topology: v6e:2x2x1
jax: 0.10.0
libtpu: 0.0.40
codegen_flags: <defaults>
</compile_context>

<pallas_src>
import functools

import jax
import jax.numpy as jnp
from jax.experimental import pallas as pl
from jax.experimental.pallas import tpu as pltpu


def _round_up(v, m):
    return (v + m - 1) // m * m


def _cdiv(a, b):
    return -(-a // b)


def _pick_compute_dtype(x_dtype):
    """Packed-bf16 compute only where the VALU supports it (v6e / v7x)."""
    if x_dtype != jnp.bfloat16:
        return jnp.float32
    try:
        kind = jax.devices()[0].device_kind.lower()
    except Exception:
        kind = ""
    if "v6" in kind or "v7" in kind:
        return jnp.bfloat16
    return jnp.float32


def _maxplus_kernel(x_ref, wt_ref, o_ref, *scratch,
                    rows_per_step, compute_dtype, num_in_tiles):
    # x_ref:  (tm, tk)   rows on sublanes, IN chunk on lanes
    # wt_ref: (tk, tn)   IN chunk on sublanes, OUT tile on lanes (bias folded in)
    # o_ref:  (tm, tn)
    # scratch[0] (only when num_in_tiles > 1): VMEM (tm, tn) running max.
    tm, tk = x_ref.shape
    tn = wt_ref.shape[1]
    rs = rows_per_step
    n_sub = tm // rs
    multi_k = num_in_tiles > 1
    acc_ref = scratch[0] if multi_k else None

    if multi_k:
        k = pl.program_id(2)

        @pl.when(k == 0)
        def _():
            acc_ref[...] = jnp.full(acc_ref.shape, -jnp.inf, acc_ref.dtype)

    @pl.loop(0, n_sub)
    def _(r):
        r0 = pl.multiple_of(r * rs, rs)

        # One dense, lane-aligned load of this sub-tile's IN chunk; tk is
        # bounded by the IN grid axis so this stays a small, fixed vreg count
        # (no (rs, IN) / (IN, OUT) values are kept live anymore).
        xblk = x_ref[pl.ds(r0, rs), :].astype(compute_dtype)          # (rs, tk)

        if multi_k:
            acc = acc_ref[pl.ds(r0, rs), :]                           # (rs, tn)
            i0 = 0
        else:
            # Single IN chunk: seed the running max from column 0 directly.
            acc = xblk[:, 0:1] + wt_ref[pl.ds(0, 1), :]               # (rs, tn)
            i0 = 1

        # Running (max, +) over the IN chunk.  Static unroll bounded by tk;
        # the (1, tn) weight row is read straight from VMEM per column.
        for i in range(i0, tk):
            acc = jnp.maximum(acc, xblk[:, i:i + 1] + wt_ref[pl.ds(i, 1), :])

        if multi_k:
            @pl.when(k < num_in_tiles - 1)
            def _():
                acc_ref[pl.ds(r0, rs), :] = acc

            @pl.when(k == num_in_tiles - 1)
            def _():
                o_ref[pl.ds(r0, rs), :] = acc.astype(o_ref.dtype)
        else:
            o_ref[pl.ds(r0, rs), :] = acc.astype(o_ref.dtype)


def maxplusmp_pallas(x, weight, bias=None, *, tm=512, rows_per_step=64,
                     tk_in=128, tn=128, compute_dtype=None):
    """Tropical max-plus linear: y[..., o] = max_i(x[..., i] + weight[o, i]) + bias[o]."""
    prefix_shape = x.shape[:-1]
    in_features = x.shape[-1]
    out_features = weight.shape[0]
    assert weight.shape == (out_features, in_features)

    x2 = x.reshape(-1, in_features)
    n = x2.shape[0]

    if compute_dtype is None:
        compute_dtype = _pick_compute_dtype(x2.dtype)

    # Fold the bias into the weight (exact: max_i(x_i + a_oi) + b_o
    # == max_i(x_i + a_oi + b_o)) -> one fewer input stream, no per-block add.
    w32 = weight.astype(jnp.float32)
    if bias is not None:
        w32 = w32 + bias.astype(jnp.float32)[:, None]
    wt = w32.T.astype(compute_dtype)                     # (IN, OUT): OUT on lanes

    # --- IN chunking (trailing "arbitrary" grid axis, P3 accumulator). ---
    if in_features <= tk_in:
        tk = in_features                                 # full-extent block
    else:
        tk = _round_up(tk_in, 128)                       # (8,128) rule for partial blocks
    num_k = _cdiv(in_features, tk)
    in_pad = num_k * tk
    if in_pad != in_features:
        # -inf weight rows are the max-plus neutral element; the x pad value
        # only needs to be finite (0 here) so padded columns never win the max.
        wt = jnp.pad(wt, ((0, in_pad - in_features), (0, 0)),
                     constant_values=-jnp.inf)
        x2 = jnp.pad(x2, ((0, 0), (0, in_pad - in_features)))

    # --- OUT tiling: full-extent below 128 lanes, 128-lane tiles above. ---
    if out_features <= 128:
        tn = out_features
    else:
        tn = _round_up(min(tn, out_features), 128)

    # --- Row tiling: rows_per_step bounds in-kernel vreg pressure, tm is the
    #     DMA tile; prefer >= 2 row tiles when rows allow (v7x megacore). ---
    rs = max(8, _round_up(min(rows_per_step, max(n, 1)), 8))
    n_pad_rows = _round_up(n, rs)
    tm = _round_up(min(tm, n_pad_rows), rs)
    if _cdiv(n, tm) < 2 and n_pad_rows >= 2 * rs:
        tm = _round_up(_cdiv(n_pad_rows, 2), rs)

    grid = (_cdiv(n, tm), _cdiv(out_features, tn), num_k)

    kernel = functools.partial(
        _maxplus_kernel,
        rows_per_step=rs,
        compute_dtype=compute_dtype,
        num_in_tiles=num_k,
    )
    scratch_shapes = ((pltpu.VMEM((tm, tn), compute_dtype),) if num_k > 1 else ())

    out = pl.pallas_call(
        kernel,
        out_shape=jax.ShapeDtypeStruct((n, out_features), x.dtype),
        grid_spec=pltpu.PrefetchScalarGridSpec(
            num_scalar_prefetch=0,
            grid=grid,
            in_specs=[
                pl.BlockSpec((tm, tk), lambda i, j, k: (i, k)),   # x: rows x IN chunk
                pl.BlockSpec((tk, tn), lambda i, j, k: (k, j)),   # wT: IN chunk x OUT tile
            ],
            out_specs=pl.BlockSpec((tm, tn), lambda i, j, k: (i, j)),
            scratch_shapes=scratch_shapes,
        ),
        compiler_params=pltpu.CompilerParams(
            dimension_semantics=("parallel", "parallel", "arbitrary"),
        ),
    )(x2, wt)

    return out.reshape((*prefix_shape, out_features))


def maxplusmp_init_fair(out_features, in_features, k, dtype=jnp.float32):
    """weight = k * (eye - 1): 0 on the diagonal, -k elsewhere (module init)."""
    eye = jnp.eye(out_features, in_features, dtype=jnp.float32)
    return (k * (eye - 1.0)).astype(dtype)


def maxplusmp_ref(x, weight, bias=None):
    """Pure-JAX f32 reference."""
    prefix_shape = x.shape[:-1]
    x2 = x.reshape(-1, x.shape[-1]).astype(jnp.float32)
    w = weight.astype(jnp.float32)
    y = jnp.max(x2[:, None, :] + w[None, :, :], axis=-1)
    if bias is not None:
        y = y + bias.astype(jnp.float32)[None, :]
    return y.reshape((*prefix_shape, weight.shape[0]))


if __name__ == "__main__":
    key = jax.random.PRNGKey(0)
    k1, k2, k3, k4, k5, k6 = jax.random.split(key, 6)

    # --- Test 1: module defaults, MaxPlusMP(32, 32, k=2.0) with bias.
    batch, seq, in_f, out_f, kk = 2, 8, 32, 32, 2.0
    x1 = jax.random.normal(k1, (batch, seq, in_f), dtype=jnp.float32)
    w1 = maxplusmp_init_fair(out_f, in_f, kk)
    b1 = jnp.full((out_f,), kk, dtype=jnp.float32)
    y1 = jax.block_until_ready(maxplusmp_pallas(x1, w1, b1))
    assert y1.shape == (batch, seq, out_f)
    assert jnp.allclose(y1, maxplusmp_ref(x1, w1, b1), atol=1e-5, rtol=1e-5), \
        "test 1 mismatch vs reference"

    # --- Test 2: non-square, no bias, row count not a multiple of the tile
    #     (full-extent small-OUT output block + row boundary path).
    x2_ = jax.random.normal(k2, (3, 5, 24), dtype=jnp.float32)
    w2_ = jax.random.normal(k3, (48, 24), dtype=jnp.float32)
    y2 = jax.block_until_ready(maxplusmp_pallas(x2_, w2_, None))
    assert y2.shape == (3, 5, 48)
    assert jnp.allclose(y2, maxplusmp_ref(x2_, w2_, None), atol=1e-5, rtol=1e-5), \
        "test 2 mismatch vs reference"

    # --- Test 3: bf16 inputs, IN > tk_in (multi-chunk "arbitrary" axis with
    #     -inf weight padding), OUT > 128 (OUT grid tile with OOB tail),
    #     > 1 row tile.  On v6e/v7x the running max is kept in bf16, so a
    #     bf16-eps sized tolerance vs the f32 reference is used.
    x3 = jax.random.normal(k4, (4, 40, 160), dtype=jnp.bfloat16)
    w3 = jax.random.normal(k5, (192, 160), dtype=jnp.bfloat16)
    b3 = (0.1 * jax.random.normal(k6, (192,))).astype(jnp.bfloat16)
    y3 = jax.block_until_ready(maxplusmp_pallas(x3, w3, b3))
    assert y3.shape == (4, 40, 192)
    assert jnp.allclose(y3.astype(jnp.float32), maxplusmp_ref(x3, w3, b3),
                        atol=1e-1, rtol=1e-2), "test 3 mismatch vs reference"

    print("KERNEL_OK")
</pallas_src>

<mosaic_0001>
module attributes {stable_mosaic.version = 11 : i64} {
  func.func @_maxplus_kernel(%arg0: i32, %arg1: i32, %arg2: i32, %arg3: memref<16x32xf32, #tpu.memory_space<vmem>>, %arg4: memref<32x32xf32, #tpu.memory_space<vmem>>, %arg5: memref<16x32xf32, #tpu.memory_space<vmem>>) attributes {dimension_semantics = [#tpu.dimension_semantics<parallel>, #tpu.dimension_semantics<parallel>, #tpu.dimension_semantics<arbitrary>], iteration_bounds = array<i64: 1, 1, 1>, scalar_prefetch = 0 : i64, scratch_operands = 0 : i64, tpu.core_type = #tpu.core_type<tc>, window_params = [{transform_indices = @transform_0, window_bounds = array<i64: 16, 32>}, {transform_indices = @transform_1, window_bounds = array<i64: 32, 32>}, {transform_indices = @transform_2, window_bounds = array<i64: 16, 32>}]} {
    %c0_i32 = arith.constant 0 : i32
    %c1_i32 = arith.constant 1 : i32
    %0 = arith.muli %c0_i32, %c1_i32 : i32
    %c0_i32_0 = arith.constant 0 : i32
    %1 = arith.addi %c0_i32_0, %0 : i32
    %c16_i32 = arith.constant 16 : i32
    %2 = arith.muli %1, %c16_i32 : i32
    %3 = tpu.assume_multiple %2, 16 : i32
    %4 = arith.index_cast %3 : i32 to index
    %c0 = arith.constant 0 : index
    %5 = vector.load %arg3[%4, %c0] : memref<16x32xf32, #tpu.memory_space<vmem>>, vector<16x32xf32>
    %6 = vector.extract_strided_slice %5 {offsets = [0, 0], sizes = [16, 1], strides = [1, 1]} : vector<16x32xf32> to vector<16x1xf32>
    %c0_1 = arith.constant 0 : index
    %c0_2 = arith.constant 0 : index
    %7 = vector.load %arg4[%c0_1, %c0_2] : memref<32x32xf32, #tpu.memory_space<vmem>>, vector<1x32xf32>
    %8 = vector.broadcast %6 : vector<16x1xf32> to vector<16x32xf32>
    %9 = vector.broadcast %7 : vector<1x32xf32> to vector<16x32xf32>
    %10 = arith.addf %8, %9 : vector<16x32xf32>
    %11 = vector.extract_strided_slice %5 {offsets = [0, 1], sizes = [16, 1], strides = [1, 1]} : vector<16x32xf32> to vector<16x1xf32>
    %c1 = arith.constant 1 : index
    %c0_3 = arith.constant 0 : index
    %12 = vector.load %arg4[%c1, %c0_3] : memref<32x32xf32, #tpu.memory_space<vmem>>, vector<1x32xf32>
    %13 = vector.broadcast %11 : vector<16x1xf32> to vector<16x32xf32>
    %14 = vector.broadcast %12 : vector<1x32xf32> to vector<16x32xf32>
    %15 = arith.addf %13, %14 : vector<16x32xf32>
    %16 = arith.maximumf %10, %15 : vector<16x32xf32>
    %17 = vector.extract_strided_slice %5 {offsets = [0, 2], sizes = [16, 1], strides = [1, 1]} : vector<16x32xf32> to vector<16x1xf32>
    %c2 = arith.constant 2 : index
    %c0_4 = arith.constant 0 : index
    %18 = vector.load %arg4[%c2, %c0_4] : memref<32x32xf32, #tpu.memory_space<vmem>>, vector<1x32xf32>
    %19 = vector.broadcast %17 : vector<16x1xf32> to vector<16x32xf32>
    %20 = vector.broadcast %18 : vector<1x32xf32> to vector<16x32xf32>
    %21 = arith.addf %19, %20 : vector<16x32xf32>
    %22 = arith.maximumf %16, %21 : vector<16x32xf32>
    %23 = vector.extract_strided_slice %5 {offsets = [0, 3], sizes = [16, 1], strides = [1, 1]} : vector<16x32xf32> to vector<16x1xf32>
    %c3 = arith.constant 3 : index
    %c0_5 = arith.constant 0 : index
    %24 = vector.load %arg4[%c3, %c0_5] : memref<32x32xf32, #tpu.memory_space<vmem>>, vector<1x32xf32>
    %25 = vector.broadcast %23 : vector<16x1xf32> to vector<16x32xf32>
    %26 = vector.broadcast %24 : vector<1x32xf32> to vector<16x32xf32>
    %27 = arith.addf %25, %26 : vector<16x32xf32>
    %28 = arith.maximumf %22, %27 : vector<16x32xf32>
    %29 = vector.extract_strided_slice %5 {offsets = [0, 4], sizes = [16, 1], strides = [1, 1]} : vector<16x32xf32> to vector<16x1xf32>
    %c4 = arith.constant 4 : index
    %c0_6 = arith.constant 0 : index
    %30 = vector.load %arg4[%c4, %c0_6] : memref<32x32xf32, #tpu.memory_space<vmem>>, vector<1x32xf32>
    %31 = vector.broadcast %29 : vector<16x1xf32> to vector<16x32xf32>
    %32 = vector.broadcast %30 : vector<1x32xf32> to vector<16x32xf32>
    %33 = arith.addf %31, %32 : vector<16x32xf32>
    %34 = arith.maximumf %28, %33 : vector<16x32xf32>
    %35 = vector.extract_strided_slice %5 {offsets = [0, 5], sizes = [16, 1], strides = [1, 1]} : vector<16x32xf32> to vector<16x1xf32>
    %c5 = arith.constant 5 : index
    %c0_7 = arith.constant 0 : index
    %36 = vector.load %arg4[%c5, %c0_7] : memref<32x32xf32, #tpu.memory_space<vmem>>, vector<1x32xf32>
    %37 = vector.broadcast %35 : vector<16x1xf32> to vector<16x32xf32>
    %38 = vector.broadcast %36 : vector<1x32xf32> to vector<16x32xf32>
    %39 = arith.addf %37, %38 : vector<16x32xf32>
    %40 = arith.maximumf %34, %39 : vector<16x32xf32>
    %41 = vector.extract_strided_slice %5 {offsets = [0, 6], sizes = [16, 1], strides = [1, 1]} : vector<16x32xf32> to vector<16x1xf32>
    %c6 = arith.constant 6 : index
    %c0_8 = arith.constant 0 : index
    %42 = vector.load %arg4[%c6, %c0_8] : memref<32x32xf32, #tpu.memory_space<vmem>>, vector<1x32xf32>
    %43 = vector.broadcast %41 : vector<16x1xf32> to vector<16x32xf32>
    %44 = vector.broadcast %42 : vector<1x32xf32> to vector<16x32xf32>
    %45 = arith.addf %43, %44 : vector<16x32xf32>
    %46 = arith.maximumf %40, %45 : vector<16x32xf32>
    %47 = vector.extract_strided_slice %5 {offsets = [0, 7], sizes = [16, 1], strides = [1, 1]} : vector<16x32xf32> to vector<16x1xf32>
    %c7 = arith.constant 7 : index
    %c0_9 = arith.constant 0 : index
    %48 = vector.load %arg4[%c7, %c0_9] : memref<32x32xf32, #tpu.memory_space<vmem>>, vector<1x32xf32>
    %49 = vector.broadcast %47 : vector<16x1xf32> to vector<16x32xf32>
    %50 = vector.broadcast %48 : vector<1x32xf32> to vector<16x32xf32>
    %51 = arith.addf %49, %50 : vector<16x32xf32>
    %52 = arith.maximumf %46, %51 : vector<16x32xf32>
    %53 = vector.extract_strided_slice %5 {offsets = [0, 8], sizes = [16, 1], strides = [1, 1]} : vector<16x32xf32> to vector<16x1xf32>
    %c8 = arith.constant 8 : index
    %c0_10 = arith.constant 0 : index
    %54 = vector.load %arg4[%c8, %c0_10] : memref<32x32xf32, #tpu.memory_space<vmem>>, vector<1x32xf32>
    %55 = vector.broadcast %53 : vector<16x1xf32> to vector<16x32xf32>
    %56 = vector.broadcast %54 : vector<1x32xf32> to vector<16x32xf32>
    %57 = arith.addf %55, %56 : vector<16x32xf32>
    %58 = arith.maximumf %52, %57 : vector<16x32xf32>
    %59 = vector.extract_strided_slice %5 {offsets = [0, 9], sizes = [16, 1], strides = [1, 1]} : vector<16x32xf32> to vector<16x1xf32>
    %c9 = arith.constant 9 : index
    %c0_11 = arith.constant 0 : index
    %60 = vector.load %arg4[%c9, %c0_11] : memref<32x32xf32, #tpu.memory_space<vmem>>, vector<1x32xf32>
    %61 = vector.broadcast %59 : vector<16x1xf32> to vector<16x32xf32>
    %62 = vector.broadcast %60 : vector<1x32xf32> to vector<16x32xf32>
    %63 = arith.addf %61, %62 : vector<16x32xf32>
    %64 = arith.maximumf %58, %63 : vector<16x32xf32>
    %65 = vector.extract_strided_slice %5 {offsets = [0, 10], sizes = [16, 1], strides = [1, 1]} : vector<16x32xf32> to vector<16x1xf32>
    %c10 = arith.constant 10 : index
    %c0_12 = arith.constant 0 : index
    %66 = vector.load %arg4[%c10, %c0_12] : memref<32x32xf32, #tpu.memory_space<vmem>>, vector<1x32xf32>
    %67 = vector.broadcast %65 : vector<16x1xf32> to vector<16x32xf32>
    %68 = vector.broadcast %66 : vector<1x32xf32> to vector<16x32xf32>
    %69 = arith.addf %67, %68 : vector<16x32xf32>
    %70 = arith.maximumf %64, %69 : vector<16x32xf32>
    %71 = vector.extract_strided_slice %5 {offsets = [0, 11], sizes = [16, 1], strides = [1, 1]} : vector<16x32xf32> to vector<16x1xf32>
    %c11 = arith.constant 11 : index
    %c0_13 = arith.constant 0 : index
    %72 = vector.load %arg4[%c11, %c0_13] : memref<32x32xf32, #tpu.memory_space<vmem>>, vector<1x32xf32>
    %73 = vector.broadcast %71 : vector<16x1xf32> to vector<16x32xf32>
    %74 = vector.broadcast %72 : vector<1x32xf32> to vector<16x32xf32>
    %75 = arith.addf %73, %74 : vector<16x32xf32>
    %76 = arith.maximumf %70, %75 : vector<16x32xf32>
    %77 = vector.extract_strided_slice %5 {offsets = [0, 12], sizes = [16, 1], strides = [1, 1]} : vector<16x32xf32> to vector<16x1xf32>
    %c12 = arith.constant 12 : index
    %c0_14 = arith.constant 0 : index
    %78 = vector.load %arg4[%c12, %c0_14] : memref<32x32xf32, #tpu.memory_space<vmem>>, vector<1x32xf32>
    %79 = vector.broadcast %77 : vector<16x1xf32> to vector<16x32xf32>
    %80 = vector.broadcast %78 : vector<1x32xf32> to vector<16x32xf32>
    %81 = arith.addf %79, %80 : vector<16x32xf32>
    %82 = arith.maximumf %76, %81 : vector<16x32xf32>
    %83 = vector.extract_strided_slice %5 {offsets = [0, 13], sizes = [16, 1], strides = [1, 1]} : vector<16x32xf32> to vector<16x1xf32>
    %c13 = arith.constant 13 : index
    %c0_15 = arith.constant 0 : index
    %84 = vector.load %arg4[%c13, %c0_15] : memref<32x32xf32, #tpu.memory_space<vmem>>, vector<1x32xf32>
    %85 = vector.broadcast %83 : vector<16x1xf32> to vector<16x32xf32>
    %86 = vector.broadcast %84 : vector<1x32xf32> to vector<16x32xf32>
    %87 = arith.addf %85, %86 : vector<16x32xf32>
    %88 = arith.maximumf %82, %87 : vector<16x32xf32>
    %89 = vector.extract_strided_slice %5 {offsets = [0, 14], sizes = [16, 1], strides = [1, 1]} : vector<16x32xf32> to vector<16x1xf32>
    %c14 = arith.constant 14 : index
    %c0_16 = arith.constant 0 : index
    %90 = vector.load %arg4[%c14, %c0_16] : memref<32x32xf32, #tpu.memory_space<vmem>>, vector<1x32xf32>
    %91 = vector.broadcast %89 : vector<16x1xf32> to vector<16x32xf32>
    %92 = vector.broadcast %90 : vector<1x32xf32> to vector<16x32xf32>
    %93 = arith.addf %91, %92 : vector<16x32xf32>
    %94 = arith.maximumf %88, %93 : vector<16x32xf32>
    %95 = vector.extract_strided_slice %5 {offsets = [0, 15], sizes = [16, 1], strides = [1, 1]} : vector<16x32xf32> to vector<16x1xf32>
    %c15 = arith.constant 15 : index
    %c0_17 = arith.constant 0 : index
    %96 = vector.load %arg4[%c15, %c0_17] : memref<32x32xf32, #tpu.memory_space<vmem>>, vector<1x32xf32>
    %97 = vector.broadcast %95 : vector<16x1xf32> to vector<16x32xf32>
    %98 = vector.broadcast %96 : vector<1x32xf32> to vector<16x32xf32>
    %99 = arith.addf %97, %98 : vector<16x32xf32>
    %100 = arith.maximumf %94, %99 : vector<16x32xf32>
    %101 = vector.extract_strided_slice %5 {offsets = [0, 16], sizes = [16, 1], strides = [1, 1]} : vector<16x32xf32> to vector<16x1xf32>
    %c16 = arith.constant 16 : index
    %c0_18 = arith.constant 0 : index
    %102 = vector.load %arg4[%c16, %c0_18] : memref<32x32xf32, #tpu.memory_space<vmem>>, vector<1x32xf32>
    %103 = vector.broadcast %101 : vector<16x1xf32> to vector<16x32xf32>
    %104 = vector.broadcast %102 : vector<1x32xf32> to vector<16x32xf32>
    %105 = arith.addf %103, %104 : vector<16x32xf32>
    %106 = arith.maximumf %100, %105 : vector<16x32xf32>
    %107 = vector.extract_strided_slice %5 {offsets = [0, 17], sizes = [16, 1], strides = [1, 1]} : vector<16x32xf32> to vector<16x1xf32>
    %c17 = arith.constant 17 : index
    %c0_19 = arith.constant 0 : index
    %108 = vector.load %arg4[%c17, %c0_19] : memref<32x32xf32, #tpu.memory_space<vmem>>, vector<1x32xf32>
    %109 = vector.broadcast %107 : vector<16x1xf32> to vector<16x32xf32>
    %110 = vector.broadcast %108 : vector<1x32xf32> to vector<16x32xf32>
    %111 = arith.addf %109, %110 : vector<16x32xf32>
    %112 = arith.maximumf %106, %111 : vector<16x32xf32>
    %113 = vector.extract_strided_slice %5 {offsets = [0, 18], sizes = [16, 1], strides = [1, 1]} : vector<16x32xf32> to vector<16x1xf32>
    %c18 = arith.constant 18 : index
    %c0_20 = arith.constant 0 : index
    %114 = vector.load %arg4[%c18, %c0_20] : memref<32x32xf32, #tpu.memory_space<vmem>>, vector<1x32xf32>
    %115 = vector.broadcast %113 : vector<16x1xf32> to vector<16x32xf32>
    %116 = vector.broadcast %114 : vector<1x32xf32> to vector<16x32xf32>
    %117 = arith.addf %115, %116 : vector<16x32xf32>
    %118 = arith.maximumf %112, %117 : vector<16x32xf32>
    %119 = vector.extract_strided_slice %5 {offsets = [0, 19], sizes = [16, 1], strides = [1, 1]} : vector<16x32xf32> to vector<16x1xf32>
    %c19 = arith.constant 19 : index
    %c0_21 = arith.constant 0 : index
    %120 = vector.load %arg4[%c19, %c0_21] : memref<32x32xf32, #tpu.memory_space<vmem>>, vector<1x32xf32>
    %121 = vector.broadcast %119 : vector<16x1xf32> to vector<16x32xf32>
    %122 = vector.broadcast %120 : vector<1x32xf32> to vector<16x32xf32>
    %123 = arith.addf %121, %122 : vector<16x32xf32>
    %124 = arith.maximumf %118, %123 : vector<16x32xf32>
    %125 = vector.extract_strided_slice %5 {offsets = [0, 20], sizes = [16, 1], strides = [1, 1]} : vector<16x32xf32> to vector<16x1xf32>
    %c20 = arith.constant 20 : index
    %c0_22 = arith.constant 0 : index
    %126 = vector.load %arg4[%c20, %c0_22] : memref<32x32xf32, #tpu.memory_space<vmem>>, vector<1x32xf32>
    %127 = vector.broadcast %125 : vector<16x1xf32> to vector<16x32xf32>
    %128 = vector.broadcast %126 : vector<1x32xf32> to vector<16x32xf32>
    %129 = arith.addf %127, %128 : vector<16x32xf32>
    %130 = arith.maximumf %124, %129 : vector<16x32xf32>
    %131 = vector.extract_strided_slice %5 {offsets = [0, 21], sizes = [16, 1], strides = [1, 1]} : vector<16x32xf32> to vector<16x1xf32>
    %c21 = arith.constant 21 : index
    %c0_23 = arith.constant 0 : index
    %132 = vector.load %arg4[%c21, %c0_23] : memref<32x32xf32, #tpu.memory_space<vmem>>, vector<1x32xf32>
    %133 = vector.broadcast %131 : vector<16x1xf32> to vector<16x32xf32>
    %134 = vector.broadcast %132 : vector<1x32xf32> to vector<16x32xf32>
    %135 = arith.addf %133, %134 : vector<16x32xf32>
    %136 = arith.maximumf %130, %135 : vector<16x32xf32>
    %137 = vector.extract_strided_slice %5 {offsets = [0, 22], sizes = [16, 1], strides = [1, 1]} : vector<16x32xf32> to vector<16x1xf32>
    %c22 = arith.constant 22 : index
    %c0_24 = arith.constant 0 : index
    %138 = vector.load %arg4[%c22, %c0_24] : memref<32x32xf32, #tpu.memory_space<vmem>>, vector<1x32xf32>
    %139 = vector.broadcast %137 : vector<16x1xf32> to vector<16x32xf32>
    %140 = vector.broadcast %138 : vector<1x32xf32> to vector<16x32xf32>
    %141 = arith.addf %139, %140 : vector<16x32xf32>
    %142 = arith.maximumf %136, %141 : vector<16x32xf32>
    %143 = vector.extract_strided_slice %5 {offsets = [0, 23], sizes = [16, 1], strides = [1, 1]} : vector<16x32xf32> to vector<16x1xf32>
    %c23 = arith.constant 23 : index
    %c0_25 = arith.constant 0 : index
    %144 = vector.load %arg4[%c23, %c0_25] : memref<32x32xf32, #tpu.memory_space<vmem>>, vector<1x32xf32>
    %145 = vector.broadcast %143 : vector<16x1xf32> to vector<16x32xf32>
    %146 = vector.broadcast %144 : vector<1x32xf32> to vector<16x32xf32>
    %147 = arith.addf %145, %146 : vector<16x32xf32>
    %148 = arith.maximumf %142, %147 : vector<16x32xf32>
    %149 = vector.extract_strided_slice %5 {offsets = [0, 24], sizes = [16, 1], strides = [1, 1]} : vector<16x32xf32> to vector<16x1xf32>
    %c24 = arith.constant 24 : index
    %c0_26 = arith.constant 0 : index
    %150 = vector.load %arg4[%c24, %c0_26] : memref<32x32xf32, #tpu.memory_space<vmem>>, vector<1x32xf32>
    %151 = vector.broadcast %149 : vector<16x1xf32> to vector<16x32xf32>
    %152 = vector.broadcast %150 : vector<1x32xf32> to vector<16x32xf32>
    %153 = arith.addf %151, %152 : vector<16x32xf32>
    %154 = arith.maximumf %148, %153 : vector<16x32xf32>
    %155 = vector.extract_strided_slice %5 {offsets = [0, 25], sizes = [16, 1], strides = [1, 1]} : vector<16x32xf32> to vector<16x1xf32>
    %c25 = arith.constant 25 : index
    %c0_27 = arith.constant 0 : index
    %156 = vector.load %arg4[%c25, %c0_27] : memref<32x32xf32, #tpu.memory_space<vmem>>, vector<1x32xf32>
    %157 = vector.broadcast %155 : vector<16x1xf32> to vector<16x32xf32>
    %158 = vector.broadcast %156 : vector<1x32xf32> to vector<16x32xf32>
    %159 = arith.addf %157, %158 : vector<16x32xf32>
    %160 = arith.maximumf %154, %159 : vector<16x32xf32>
    %161 = vector.extract_strided_slice %5 {offsets = [0, 26], sizes = [16, 1], strides = [1, 1]} : vector<16x32xf32> to vector<16x1xf32>
    %c26 = arith.constant 26 : index
    %c0_28 = arith.constant 0 : index
    %162 = vector.load %arg4[%c26, %c0_28] : memref<32x32xf32, #tpu.memory_space<vmem>>, vector<1x32xf32>
    %163 = vector.broadcast %161 : vector<16x1xf32> to vector<16x32xf32>
    %164 = vector.broadcast %162 : vector<1x32xf32> to vector<16x32xf32>
    %165 = arith.addf %163, %164 : vector<16x32xf32>
    %166 = arith.maximumf %160, %165 : vector<16x32xf32>
    %167 = vector.extract_strided_slice %5 {offsets = [0, 27], sizes = [16, 1], strides = [1, 1]} : vector<16x32xf32> to vector<16x1xf32>
    %c27 = arith.constant 27 : index
    %c0_29 = arith.constant 0 : index
    %168 = vector.load %arg4[%c27, %c0_29] : memref<32x32xf32, #tpu.memory_space<vmem>>, vector<1x32xf32>
    %169 = vector.broadcast %167 : vector<16x1xf32> to vector<16x32xf32>
    %170 = vector.broadcast %168 : vector<1x32xf32> to vector<16x32xf32>
    %171 = arith.addf %169, %170 : vector<16x32xf32>
    %172 = arith.maximumf %166, %171 : vector<16x32xf32>
    %173 = vector.extract_strided_slice %5 {offsets = [0, 28], sizes = [16, 1], strides = [1, 1]} : vector<16x32xf32> to vector<16x1xf32>
    %c28 = arith.constant 28 : index
    %c0_30 = arith.constant 0 : index
    %174 = vector.load %arg4[%c28, %c0_30] : memref<32x32xf32, #tpu.memory_space<vmem>>, vector<1x32xf32>
    %175 = vector.broadcast %173 : vector<16x1xf32> to vector<16x32xf32>
    %176 = vector.broadcast %174 : vector<1x32xf32> to vector<16x32xf32>
    %177 = arith.addf %175, %176 : vector<16x32xf32>
    %178 = arith.maximumf %172, %177 : vector<16x32xf32>
    %179 = vector.extract_strided_slice %5 {offsets = [0, 29], sizes = [16, 1], strides = [1, 1]} : vector<16x32xf32> to vector<16x1xf32>
    %c29 = arith.constant 29 : index
    %c0_31 = arith.constant 0 : index
    %180 = vector.load %arg4[%c29, %c0_31] : memref<32x32xf32, #tpu.memory_space<vmem>>, vector<1x32xf32>
    %181 = vector.broadcast %179 : vector<16x1xf32> to vector<16x32xf32>
    %182 = vector.broadcast %180 : vector<1x32xf32> to vector<16x32xf32>
    %183 = arith.addf %181, %182 : vector<16x32xf32>
    %184 = arith.maximumf %178, %183 : vector<16x32xf32>
    %185 = vector.extract_strided_slice %5 {offsets = [0, 30], sizes = [16, 1], strides = [1, 1]} : vector<16x32xf32> to vector<16x1xf32>
    %c30 = arith.constant 30 : index
    %c0_32 = arith.constant 0 : index
    %186 = vector.load %arg4[%c30, %c0_32] : memref<32x32xf32, #tpu.memory_space<vmem>>, vector<1x32xf32>
    %187 = vector.broadcast %185 : vector<16x1xf32> to vector<16x32xf32>
    %188 = vector.broadcast %186 : vector<1x32xf32> to vector<16x32xf32>
    %189 = arith.addf %187, %188 : vector<16x32xf32>
    %190 = arith.maximumf %184, %189 : vector<16x32xf32>
    %191 = vector.extract_strided_slice %5 {offsets = [0, 31], sizes = [16, 1], strides = [1, 1]} : vector<16x32xf32> to vector<16x1xf32>
    %c31 = arith.constant 31 : index
    %c0_33 = arith.constant 0 : index
    %192 = vector.load %arg4[%c31, %c0_33] : memref<32x32xf32, #tpu.memory_space<vmem>>, vector<1x32xf32>
    %193 = vector.broadcast %191 : vector<16x1xf32> to vector<16x32xf32>
    %194 = vector.broadcast %192 : vector<1x32xf32> to vector<16x32xf32>
    %195 = arith.addf %193, %194 : vector<16x32xf32>
    %196 = arith.maximumf %190, %195 : vector<16x32xf32>
    %197 = arith.index_cast %3 : i32 to index
    %c0_34 = arith.constant 0 : index
    %198 = vector.load %arg5[%197, %c0_34] : memref<16x32xf32, #tpu.memory_space<vmem>>, vector<16x32xf32>
    tpu.vector_store %arg5[%197, %c0_34], %196 {strides = array<i32>} : memref<16x32xf32, #tpu.memory_space<vmem>>, vector<16x32xf32>,
    %c1_i32_35 = arith.constant 1 : i32
    return
  }
  func.func @transform_0(%arg0: i32, %arg1: i32, %arg2: i32) -> (i32, i32) {
    %c0_i32 = arith.constant 0 : i32
    return %arg0, %arg2 : i32, i32
  }
  func.func @transform_1(%arg0: i32, %arg1: i32, %arg2: i32) -> (i32, i32) {
    %c0_i32 = arith.constant 0 : i32
    return %arg2, %arg1 : i32, i32
  }
  func.func @transform_2(%arg0: i32, %arg1: i32, %arg2: i32) -> (i32, i32) {
    %c0_i32 = arith.constant 0 : i32
    return %arg0, %arg1 : i32, i32
  }
}

</mosaic_0001>

<llo_original>
// kernel: tpu_custom_call.1
$region0: #{tpu_custom_call.1}
  #allocation0 [shape = 'u32[]', space=smem, size = 0x4, offset = 0x4, fixed_abs, tag = 'smem constant byte address 0x4 - core index']
  #allocation1 [shape = 'u32[144,128]{1,0:T(1,128)}', space=vmem, size = 0x12000, scoped, tag = 'internal scratch']
  %s0 = inlined_call_operand.hbm [shape: f32[16,32], index: 0, kind: input, shape index: {}]
  %s1 = inlined_call_operand.hbm [shape: f32[32,32], index: 1, kind: input, shape index: {}]
  %s2 = inlined_call_operand.hbm [shape: f32[16,32], index: 2, kind: output, shape index: {}]
  %s3 = sld [smem:[#allocation0]]
  $region26: #{tpu_custom_call.1} parent=0
    _
  %s5 = ssub.s32 1, %s3
  %s6 = scalar_select 0, %s5, %s3
  $region1: #{tpu_custom_call.1} parent=0
    #allocation2 [shape = 'u8[8192]{0}', space=vmem, size = 0x2000, scoped, tag = 'input window, operand 0, single buffered']
    #allocation3 [shape = 's32[1]{0}', space=sflag, size = 0x4, scoped, tag = 'scoped memory for tpu_custom_call.1']
    #allocation4 [shape = 's32[1]{0}', space=sflag, size = 0x4, scoped, tag = 'scoped memory for tpu_custom_call.1']
    #allocation5 [shape = 'u8[16384]{0}', space=vmem, size = 0x4000, scoped, tag = 'input window, operand 1, single buffered']
    #allocation6 [shape = 's32[1]{0}', space=sflag, size = 0x4, scoped, tag = 'scoped memory for tpu_custom_call.1']
    #allocation7 [shape = 'u8[8192]{0}', space=vmem, size = 0x2000, scoped, tag = 'output window, operand 0, single buffered']
    %7 = vsyncpa [#allocation3], 0
    %8 = vsyncpa [#allocation6], 0
    %9 = vsyncpa [#allocation4], 0
    // Predicated region
    $region2: #{tpu_custom_call.1} parent=1 // pred_check
      _
    $region3: #{tpu_custom_call.1} parent=1 // pred_check_branch
      %11 = sbr.rel (0) target = $region5
    $region4: #{tpu_custom_call.1} parent=1 // pred_region
      %s13 = ssub.s32 256, 256
      %14 = vsyncadd [#allocation3], %s13
      %s15 = sshll.u32 [#allocation2], 4
      %s16 = int_to_ptr.vmem [resolvable:$true] %s15
      %21 = dma.hbm_to_vmem [thread:$0]  %s0, 256, %s16, [#allocation3], 128, 128, 8
    $region5: #{tpu_custom_call.1} parent=1 // pred_fallthru
      _
    // Predicated region
    $region6: #{tpu_custom_call.1} parent=1 // pred_check
      _
    $region7: #{tpu_custom_call.1} parent=1 // pred_check_branch
      %23 = sbr.rel (0) target = $region9
    $region8: #{tpu_custom_call.1} parent=1 // pred_region
      %s25 = ssub.s32 512, 512
      %26 = vsyncadd [#allocation6], %s25
      %s27 = sshll.u32 [#allocation5], 4
      %s28 = int_to_ptr.vmem [resolvable:$true] %s27
      %33 = dma.hbm_to_vmem [thread:$0]  %s1, 512, %s28, [#allocation6], 128, 128, 8
    $region9: #{tpu_custom_call.1} parent=1 // pred_fallthru
      _
    // Predicated region
    $region10: #{tpu_custom_call.1} parent=1 // pred_check
      _
    $region11: #{tpu_custom_call.1} parent=1 // pred_check_branch
      %35 = sbr.rel (0) target = $region13
    $region12: #{tpu_custom_call.1} parent=1 // pred_region
      %36 = dma.done [#allocation3], 256
    $region13: #{tpu_custom_call.1} parent=1 // pred_fallthru
      _
    // Predicated region
    $region14: #{tpu_custom_call.1} parent=1 // pred_check
      _
    $region15: #{tpu_custom_call.1} parent=1 // pred_check_branch
      %38 = sbr.rel (0) target = $region17
    $region16: #{tpu_custom_call.1} parent=1 // pred_region
      %39 = dma.done [#allocation6], 512
    $region17: #{tpu_custom_call.1} parent=1 // pred_fallthru
      _
    %v40 = vld [vmem:[#allocation2] sm:$0xff]
    %v41 = vld [vmem:[#allocation2 + $0x8] sm:$0xff]
    %v42 = vld [vmem:[#allocation5] sm:$0x1]
    %44 = vset.pattern.permute.xlu0 0
    %45 = vperm.xlu0 %44, %v40
    %v46 = vpop.permute.xlu0 %45
    %49 = vset.pattern.permute.xlu0 0
    %50 = vperm.xlu0 %49, %v41
    %v51 = vpop.permute.xlu0 %50
    %v53 = vlaneseq
    %v54 = vshrl.u32 %v53, 7
    %v55 = vsub.s32 0, %v54
    %v56 = vrot.slane %v42, %v55
    %v57 = vadd.f32 %v46, %v56
    %v58 = vadd.f32 %v51, %v56
    %v59 = vld [vmem:[#allocation5 + $0x1] sm:$0x1]
    %60 = vset.pattern.permute.xlu0 1
    %61 = vperm.xlu0 %60, %v40
    %v62 = vpop.permute.xlu0 %61
    %64 = vset.pattern.permute.xlu0 1
    %65 = vperm.xlu0 %64, %v41
    %v66 = vpop.permute.xlu0 %65
    %v68 = vlaneseq
    %v69 = vshrl.u32 %v68, 7
    %v70 = vsub.s32 0, %v69
    %v71 = vrot.slane %v59, %v70
    %v72 = vadd.f32 %v62, %v71
    %v73 = vadd.f32 %v66, %v71
    %v74 = vmax.f32 %v57, %v72
    %v75 = vmax.f32 %v58, %v73
    %v76 = vld [vmem:[#allocation5 + $0x2] sm:$0x1]
    %77 = vset.pattern.permute.xlu0 2
    %78 = vperm.xlu0 %77, %v40
    %v79 = vpop.permute.xlu0 %78
    %81 = vset.pattern.permute.xlu0 2
    %82 = vperm.xlu0 %81, %v41
    %v83 = vpop.permute.xlu0 %82
    %v85 = vlaneseq
    %v86 = vshrl.u32 %v85, 7
    %v87 = vsub.s32 0, %v86
    %v88 = vrot.slane %v76, %v87
    %v89 = vadd.f32 %v79, %v88
    %v90 = vadd.f32 %v83, %v88
    %v91 = vmax.f32 %v74, %v89
    %v92 = vmax.f32 %v75, %v90
    %v93 = vld [vmem:[#allocation5 + $0x3] sm:$0x1]
    %94 = vset.pattern.permute.xlu0 3
    %95 = vperm.xlu0 %94, %v40
    %v96 = vpop.permute.xlu0 %95
    %98 = vset.pattern.permute.xlu0 3
    %99 = vperm.xlu0 %98, %v41
    %v100 = vpop.permute.xlu0 %99
    %v102 = vlaneseq
    %v103 = vshrl.u32 %v102, 7
    %v104 = vsub.s32 0, %v103
    %v105 = vrot.slane %v93, %v104
    %v106 = vadd.f32 %v96, %v105
    %v107 = vadd.f32 %v100, %v105
    %v108 = vmax.f32 %v91, %v106
    %v109 = vmax.f32 %v92, %v107
    %v110 = vld [vmem:[#allocation5 + $0x4] sm:$0x1]
    %111 = vset.pattern.permute.xlu0 4
    %112 = vperm.xlu0 %111, %v40
    %v113 = vpop.permute.xlu0 %112
    %115 = vset.pattern.permute.xlu0 4
    %116 = vperm.xlu0 %115, %v41
    %v117 = vpop.permute.xlu0 %116
    %v119 = vlaneseq
    %v120 = vshrl.u32 %v119, 7
    %v121 = vsub.s32 0, %v120
    %v122 = vrot.slane %v110, %v121
    %v123 = vadd.f32 %v113, %v122
    %v124 = vadd.f32 %v117, %v122
    %v125 = vmax.f32 %v108, %v123
    %v126 = vmax.f32 %v109, %v124
    %v127 = vld [vmem:[#allocation5 + $0x5] sm:$0x1]
    %128 = vset.pattern.permute.xlu0 5
    %129 = vperm.xlu0 %128, %v40
    %v130 = vpop.permute.xlu0 %129
    %132 = vset.pattern.permute.xlu0 5
    %133 = vperm.xlu0 %132, %v41
    %v134 = vpop.permute.xlu0 %133
    %v136 = vlaneseq
    %v137 = vshrl.u32 %v136, 7
    %v138 = vsub.s32 0, %v137
    %v139 = vrot.slane %v127, %v138
    %v140 = vadd.f32 %v130, %v139
    %v141 = vadd.f32 %v134, %v139
    %v142 = vmax.f32 %v125, %v140
    %v143 = vmax.f32 %v126, %v141
    %v144 = vld [vmem:[#allocation5 + $0x6] sm:$0x1]
    %145 = vset.pattern.permute.xlu0 6
    %146 = vperm.xlu0 %145, %v40
    %v147 = vpop.permute.xlu0 %146
    %149 = vset.pattern.permute.xlu0 6
    %150 = vperm.xlu0 %149, %v41
    %v151 = vpop.permute.xlu0 %150
    %v153 = vlaneseq
    %v154 = vshrl.u32 %v153, 7
    %v155 = vsub.s32 0, %v154
    %v156 = vrot.slane %v144, %v155
    %v157 = vadd.f32 %v147, %v156
    %v158 = vadd.f32 %v151, %v156
    %v159 = vmax.f32 %v142, %v157
    %v160 = vmax.f32 %v143, %v158
    %v161 = vld [vmem:[#allocation5 + $0x7] sm:$0x1]
    %162 = vset.pattern.permute.xlu0 7
    %163 = vperm.xlu0 %162, %v40
    %v164 = vpop.permute.xlu0 %163
    %166 = vset.pattern.permute.xlu0 7
    %167 = vperm.xlu0 %166, %v41
    %v168 = vpop.permute.xlu0 %167
    %v170 = vlaneseq
    %v171 = vshrl.u32 %v170, 7
    %v172 = vsub.s32 0, %v171
    %v173 = vrot.slane %v161, %v172
    %v174 = vadd.f32 %v164, %v173
    %v175 = vadd.f32 %v168, %v173
    %v176 = vmax.f32 %v159, %v174
    %v177 = vmax.f32 %v160, %v175
    %v178 = vld [vmem:[#allocation5 + $0x8] sm:$0x1]
    %179 = vset.pattern.permute.xlu0 8
    %180 = vperm.xlu0 %179, %v40
    %v181 = vpop.permute.xlu0 %180
    %183 = vset.pattern.permute.xlu0 8
    %184 = vperm.xlu0 %183, %v41
    %v185 = vpop.permute.xlu0 %184
    %v187 = vlaneseq
    %v188 = vshrl.u32 %v187, 7
    %v189 = vsub.s32 0, %v188
    %v190 = vrot.slane %v178, %v189
    %v191 = vadd.f32 %v181, %v190
    %v192 = vadd.f32 %v185, %v190
    %v193 = vmax.f32 %v176, %v191
    %v194 = vmax.f32 %v177, %v192
    %v195 = vld [vmem:[#allocation5 + $0x9] sm:$0x1]
    %196 = vset.pattern.permute.xlu0 9
    %197 = vperm.xlu0 %196, %v40
    %v198 = vpop.permute.xlu0 %197
    %200 = vset.pattern.permute.xlu0 9
    %201 = vperm.xlu0 %200, %v41
    %v202 = vpop.permute.xlu0 %201
    %v204 = vlaneseq
    %v205 = vshrl.u32 %v204, 7
    %v206 = vsub.s32 0, %v205
    %v207 = vrot.slane %v195, %v206
    %v208 = vadd.f32 %v198, %v207
    %v209 = vadd.f32 %v202, %v207
    %v210 = vmax.f32 %v193, %v208
    %v211 = vmax.f32 %v194, %v209
    %v212 = vld [vmem:[#allocation5 + $0xa] sm:$0x1]
    %213 = vset.pattern.permute.xlu0 10
    %214 = vperm.xlu0 %213, %v40
    %v215 = vpop.permute.xlu0 %214
    %217 = vset.pattern.permute.xlu0 10
    %218 = vperm.xlu0 %217, %v41
    %v219 = vpop.permute.xlu0 %218
    %v221 = vlaneseq
    %v222 = vshrl.u32 %v221, 7
    %v223 = vsub.s32 0, %v222
    %v224 = vrot.slane %v212, %v223
    %v225 = vadd.f32 %v215, %v224
    %v226 = vadd.f32 %v219, %v224
    %v227 = vmax.f32 %v210, %v225
    %v228 = vmax.f32 %v211, %v226
    %v229 = vld [vmem:[#allocation5 + $0xb] sm:$0x1]
    %230 = vset.pattern.permute.xlu0 11
    %231 = vperm.xlu0 %230, %v40
    %v232 = vpop.permute.xlu0 %231
    %234 = vset.pattern.permute.xlu0 11
    %235 = vperm.xlu0 %234, %v41
    %v236 = vpop.permute.xlu0 %235
    %v238 = vlaneseq
    %v239 = vshrl.u32 %v238, 7
    %v240 = vsub.s32 0, %v239
    %v241 = vrot.slane %v229, %v240
    %v242 = vadd.f32 %v232, %v241
    %v243 = vadd.f32 %v236, %v241
    %v244 = vmax.f32 %v227, %v242
    %v245 = vmax.f32 %v228, %v243
    %v246 = vld [vmem:[#allocation5 + $0xc] sm:$0x1]
    %247 = vset.pattern.permute.xlu0 12
    %248 = vperm.xlu0 %247, %v40
    %v249 = vpop.permute.xlu0 %248
    %251 = vset.pattern.permute.xlu0 12
    %252 = vperm.xlu0 %251, %v41
    %v253 = vpop.permute.xlu0 %252
    %v255 = vlaneseq
    %v256 = vshrl.u32 %v255, 7
    %v257 = vsub.s32 0, %v256
    %v258 = vrot.slane %v246, %v257
    %v259 = vadd.f32 %v249, %v258
    %v260 = vadd.f32 %v253, %v258
    %v261 = vmax.f32 %v244, %v259
    %v262 = vmax.f32 %v245, %v260
    %v263 = vld [vmem:[#allocation5 + $0xd] sm:$0x1]
    %264 = vset.pattern.permute.xlu0 13
    %265 = vperm.xlu0 %264, %v40
    %v266 = vpop.permute.xlu0 %265
    %268 = vset.pattern.permute.xlu0 13
    %269 = vperm.xlu0 %268, %v41
    %v270 = vpop.permute.xlu0 %269
    %v272 = vlaneseq
    %v273 = vshrl.u32 %v272, 7
    %v274 = vsub.s32 0, %v273
    %v275 = vrot.slane %v263, %v274
    %v276 = vadd.f32 %v266, %v275
    %v277 = vadd.f32 %v270, %v275
    %v278 = vmax.f32 %v261, %v276
    %v279 = vmax.f32 %v262, %v277
    %v280 = vld [vmem:[#allocation5 + $0xe] sm:$0x1]
    %281 = vset.pattern.permute.xlu0 14
    %282 = vperm.xlu0 %281, %v40
    %v283 = vpop.permute.xlu0 %282
    %285 = vset.pattern.permute.xlu0 14
    %286 = vperm.xlu0 %285, %v41
    %v287 = vpop.permute.xlu0 %286
    %v289 = vlaneseq
    %v290 = vshrl.u32 %v289, 7
    %v291 = vsub.s32 0, %v290
    %v292 = vrot.slane %v280, %v291
    %v293 = vadd.f32 %v283, %v292
    %v294 = vadd.f32 %v287, %v292
    %v295 = vmax.f32 %v278, %v293
    %v296 = vmax.f32 %v279, %v294
    %v297 = vld [vmem:[#allocation5 + $0xf] sm:$0x1]
    %298 = vset.pattern.permute.xlu0 15
    %299 = vperm.xlu0 %298, %v40
    %v300 = vpop.permute.xlu0 %299
    %302 = vset.pattern.permute.xlu0 15
    %303 = vperm.xlu0 %302, %v41
    %v304 = vpop.permute.xlu0 %303
    %v306 = vlaneseq
    %v307 = vshrl.u32 %v306, 7
    %v308 = vsub.s32 0, %v307
    %v309 = vrot.slane %v297, %v308
    %v310 = vadd.f32 %v300, %v309
    %v311 = vadd.f32 %v304, %v309
    %v312 = vmax.f32 %v295, %v310
    %v313 = vmax.f32 %v296, %v311
    %v314 = vld [vmem:[#allocation5 + $0x10] sm:$0x1]
    %315 = vset.pattern.permute.xlu0 16
    %316 = vperm.xlu0 %315, %v40
    %v317 = vpop.permute.xlu0 %316
    %319 = vset.pattern.permute.xlu0 16
    %320 = vperm.xlu0 %319, %v41
    %v321 = vpop.permute.xlu0 %320
    %v323 = vlaneseq
    %v324 = vshrl.u32 %v323, 7
    %v325 = vsub.s32 0, %v324
    %v326 = vrot.slane %v314, %v325
    %v327 = vadd.f32 %v317, %v326
    %v328 = vadd.f32 %v321, %v326
    %v329 = vmax.f32 %v312, %v327
    %v330 = vmax.f32 %v313, %v328
    %v331 = vld [vmem:[#allocation5 + $0x11] sm:$0x1]
    %332 = vset.pattern.permute.xlu0 17
    %333 = vperm.xlu0 %332, %v40
    %v334 = vpop.permute.xlu0 %333
    %336 = vset.pattern.permute.xlu0 17
    %337 = vperm.xlu0 %336, %v41
    %v338 = vpop.permute.xlu0 %337
    %v340 = vlaneseq
    %v341 = vshrl.u32 %v340, 7
    %v342 = vsub.s32 0, %v341
    %v343 = vrot.slane %v331, %v342
    %v344 = vadd.f32 %v334, %v343
    %v345 = vadd.f32 %v338, %v343
    %v346 = vmax.f32 %v329, %v344
    %v347 = vmax.f32 %v330, %v345
    %v348 = vld [vmem:[#allocation5 + $0x12] sm:$0x1]
    %349 = vset.pattern.permute.xlu0 18
    %350 = vperm.xlu0 %349, %v40
    %v351 = vpop.permute.xlu0 %350
    %353 = vset.pattern.permute.xlu0 18
    %354 = vperm.xlu0 %353, %v41
    %v355 = vpop.permute.xlu0 %354
    %v357 = vlaneseq
    %v358 = vshrl.u32 %v357, 7
    %v359 = vsub.s32 0, %v358
    %v360 = vrot.slane %v348, %v359
    %v361 = vadd.f32 %v351, %v360
    %v362 = vadd.f32 %v355, %v360
    %v363 = vmax.f32 %v346, %v361
    %v364 = vmax.f32 %v347, %v362
    %v365 = vld [vmem:[#allocation5 + $0x13] sm:$0x1]
    %366 = vset.pattern.permute.xlu0 19
    %367 = vperm.xlu0 %366, %v40
    %v368 = vpop.permute.xlu0 %367
    %370 = vset.pattern.permute.xlu0 19
    %371 = vperm.xlu0 %370, %v41
    %v372 = vpop.permute.xlu0 %371
    %v374 = vlaneseq
    %v375 = vshrl.u32 %v374, 7
    %v376 = vsub.s32 0, %v375
    %v377 = vrot.slane %v365, %v376
    %v378 = vadd.f32 %v368, %v377
    %v379 = vadd.f32 %v372, %v377
    %v380 = vmax.f32 %v363, %v378
    %v381 = vmax.f32 %v364, %v379
    %v382 = vld [vmem:[#allocation5 + $0x14] sm:$0x1]
    %383 = vset.pattern.permute.xlu0 20
    %384 = vperm.xlu0 %383, %v40
    %v385 = vpop.permute.xlu0 %384
    %387 = vset.pattern.permute.xlu0 20
    %388 = vperm.xlu0 %387, %v41
    %v389 = vpop.permute.xlu0 %388
    %v391 = vlaneseq
    %v392 = vshrl.u32 %v391, 7
    %v393 = vsub.s32 0, %v392
    %v394 = vrot.slane %v382, %v393
    %v395 = vadd.f32 %v385, %v394
    %v396 = vadd.f32 %v389, %v394
    %v397 = vmax.f32 %v380, %v395
    %v398 = vmax.f32 %v381, %v396
    %v399 = vld [vmem:[#allocation5 + $0x15] sm:$0x1]
    %400 = vset.pattern.permute.xlu0 21
    %401 = vperm.xlu0 %400, %v40
    %v402 = vpop.permute.xlu0 %401
    %404 = vset.pattern.permute.xlu0 21
    %405 = vperm.xlu0 %404, %v41
    %v406 = vpop.permute.xlu0 %405
    %v408 = vlaneseq
    %v409 = vshrl.u32 %v408, 7
    %v410 = vsub.s32 0, %v409
    %v411 = vrot.slane %v399, %v410
    %v412 = vadd.f32 %v402, %v411
    %v413 = vadd.f32 %v406, %v411
    %v414 = vmax.f32 %v397, %v412
    %v415 = vmax.f32 %v398, %v413
    %v416 = vld [vmem:[#allocation5 + $0x16] sm:$0x1]
    %417 = vset.pattern.permute.xlu0 22
    %418 = vperm.xlu0 %417, %v40
    %v419 = vpop.permute.xlu0 %418
    %421 = vset.pattern.permute.xlu0 22
    %422 = vperm.xlu0 %421, %v41
    %v423 = vpop.permute.xlu0 %422
    %v425 = vlaneseq
    %v426 = vshrl.u32 %v425, 7
    %v427 = vsub.s32 0, %v426
    %v428 = vrot.slane %v416, %v427
    %v429 = vadd.f32 %v419, %v428
    %v430 = vadd.f32 %v423, %v428
    %v431 = vmax.f32 %v414, %v429
    %v432 = vmax.f32 %v415, %v430
    %v433 = vld [vmem:[#allocation5 + $0x17] sm:$0x1]
    %434 = vset.pattern.permute.xlu0 23
    %435 = vperm.xlu0 %434, %v40
    %v436 = vpop.permute.xlu0 %435
    %438 = vset.pattern.permute.xlu0 23
    %439 = vperm.xlu0 %438, %v41
    %v440 = vpop.permute.xlu0 %439
    %v442 = vlaneseq
    %v443 = vshrl.u32 %v442, 7
    %v444 = vsub.s32 0, %v443
    %v445 = vrot.slane %v433, %v444
    %v446 = vadd.f32 %v436, %v445
    %v447 = vadd.f32 %v440, %v445
    %v448 = vmax.f32 %v431, %v446
    %v449 = vmax.f32 %v432, %v447
    %v450 = vld [vmem:[#allocation5 + $0x18] sm:$0x1]
    %451 = vset.pattern.permute.xlu0 24
    %452 = vperm.xlu0 %451, %v40
    %v453 = vpop.permute.xlu0 %452
    %455 = vset.pattern.permute.xlu0 24
    %456 = vperm.xlu0 %455, %v41
    %v457 = vpop.permute.xlu0 %456
    %v459 = vlaneseq
    %v460 = vshrl.u32 %v459, 7
    %v461 = vsub.s32 0, %v460
    %v462 = vrot.slane %v450, %v461
    %v463 = vadd.f32 %v453, %v462
    %v464 = vadd.f32 %v457, %v462
    %v465 = vmax.f32 %v448, %v463
    %v466 = vmax.f32 %v449, %v464
    %v467 = vld [vmem:[#allocation5 + $0x19] sm:$0x1]
    %468 = vset.pattern.permute.xlu0 25
    %469 = vperm.xlu0 %468, %v40
    %v470 = vpop.permute.xlu0 %469
    %472 = vset.pattern.permute.xlu0 25
    %473 = vperm.xlu0 %472, %v41
    %v474 = vpop.permute.xlu0 %473
    %v476 = vlaneseq
    %v477 = vshrl.u32 %v476, 7
    %v478 = vsub.s32 0, %v477
    %v479 = vrot.slane %v467, %v478
    %v480 = vadd.f32 %v470, %v479
    %v481 = vadd.f32 %v474, %v479
    %v482 = vmax.f32 %v465, %v480
    %v483 = vmax.f32 %v466, %v481
    %v484 = vld [vmem:[#allocation5 + $0x1a] sm:$0x1]
    %485 = vset.pattern.permute.xlu0 26
    %486 = vperm.xlu0 %485, %v40
    %v487 = vpop.permute.xlu0 %486
    %489 = vset.pattern.permute.xlu0 26
    %490 = vperm.xlu0 %489, %v41
    %v491 = vpop.permute.xlu0 %490
    %v493 = vlaneseq
    %v494 = vshrl.u32 %v493, 7
    %v495 = vsub.s32 0, %v494
    %v496 = vrot.slane %v484, %v495
    %v497 = vadd.f32 %v487, %v496
    %v498 = vadd.f32 %v491, %v496
    %v499 = vmax.f32 %v482, %v497
    %v500 = vmax.f32 %v483, %v498
    %v501 = vld [vmem:[#allocation5 + $0x1b] sm:$0x1]
    %502 = vset.pattern.permute.xlu0 27
    %503 = vperm.xlu0 %502, %v40
    %v504 = vpop.permute.xlu0 %503
    %506 = vset.pattern.permute.xlu0 27
    %507 = vperm.xlu0 %506, %v41
    %v508 = vpop.permute.xlu0 %507
    %v510 = vlaneseq
    %v511 = vshrl.u32 %v510, 7
    %v512 = vsub.s32 0, %v511
    %v513 = vrot.slane %v501, %v512
    %v514 = vadd.f32 %v504, %v513
    %v515 = vadd.f32 %v508, %v513
    %v516 = vmax.f32 %v499, %v514
    %v517 = vmax.f32 %v500, %v515
    %v518 = vld [vmem:[#allocation5 + $0x1c] sm:$0x1]
    %519 = vset.pattern.permute.xlu0 28
    %520 = vperm.xlu0 %519, %v40
    %v521 = vpop.permute.xlu0 %520
    %523 = vset.pattern.permute.xlu0 28
    %524 = vperm.xlu0 %523, %v41
    %v525 = vpop.permute.xlu0 %524
    %v527 = vlaneseq
    %v528 = vshrl.u32 %v527, 7
    %v529 = vsub.s32 0, %v528
    %v530 = vrot.slane %v518, %v529
    %v531 = vadd.f32 %v521, %v530
    %v532 = vadd.f32 %v525, %v530
    %v533 = vmax.f32 %v516, %v531
    %v534 = vmax.f32 %v517, %v532
    %v535 = vld [vmem:[#allocation5 + $0x1d] sm:$0x1]
    %536 = vset.pattern.permute.xlu0 29
    %537 = vperm.xlu0 %536, %v40
    %v538 = vpop.permute.xlu0 %537
    %540 = vset.pattern.permute.xlu0 29
    %541 = vperm.xlu0 %540, %v41
    %v542 = vpop.permute.xlu0 %541
    %v544 = vlaneseq
    %v545 = vshrl.u32 %v544, 7
    %v546 = vsub.s32 0, %v545
    %v547 = vrot.slane %v535, %v546
    %v548 = vadd.f32 %v538, %v547
    %v549 = vadd.f32 %v542, %v547
    %v550 = vmax.f32 %v533, %v548
    %v551 = vmax.f32 %v534, %v549
    %v552 = vld [vmem:[#allocation5 + $0x1e] sm:$0x1]
    %553 = vset.pattern.permute.xlu0 30
    %554 = vperm.xlu0 %553, %v40
    %v555 = vpop.permute.xlu0 %554
    %557 = vset.pattern.permute.xlu0 30
    %558 = vperm.xlu0 %557, %v41
    %v559 = vpop.permute.xlu0 %558
    %v561 = vlaneseq
    %v562 = vshrl.u32 %v561, 7
    %v563 = vsub.s32 0, %v562
    %v564 = vrot.slane %v552, %v563
    %v565 = vadd.f32 %v555, %v564
    %v566 = vadd.f32 %v559, %v564
    %v567 = vmax.f32 %v550, %v565
    %v568 = vmax.f32 %v551, %v566
    %v569 = vld [vmem:[#allocation5 + $0x1f] sm:$0x1]
    %570 = vset.pattern.permute.xlu0 31
    %571 = vperm.xlu0 %570, %v40
    %v572 = vpop.permute.xlu0 %571
    %574 = vset.pattern.permute.xlu0 31
    %575 = vperm.xlu0 %574, %v41
    %v576 = vpop.permute.xlu0 %575
    %v578 = vlaneseq
    %v579 = vshrl.u32 %v578, 7
    %v580 = vsub.s32 0, %v579
    %v581 = vrot.slane %v569, %v580
    %v582 = vadd.f32 %v572, %v581
    %v583 = vadd.f32 %v576, %v581
    %v584 = vmax.f32 %v567, %v582
    %v585 = vmax.f32 %v568, %v583
    %vm586 = vcmask 261120
    %587 = vst.msk [vmem:[#allocation7] sm:$0xff] %vm586, %v584
    %588 = vst.msk [vmem:[#allocation7 + $0x8] sm:$0xff] %vm586, %v585
    // Predicated region
    $region18: #{tpu_custom_call.1} parent=1 // pred_check
      _
    $region19: #{tpu_custom_call.1} parent=1 // pred_check_branch
      %590 = sbr.rel (0) target = $region21
    $region20: #{tpu_custom_call.1} parent=1 // pred_region
      %s592 = ssub.s32 256, 256
      %593 = vsyncadd [#allocation4], %s592
      %s594 = sshll.u32 [#allocation7], 4
      %s595 = int_to_ptr.vmem [resolvable:$true] %s594
      %600 = dma.vmem_to_hbm [thread:$0]  %s595, 256, %s2, [#allocation4], 128, 128, 8
    $region21: #{tpu_custom_call.1} parent=1 // pred_fallthru
      _
    // Predicated region
    $region22: #{tpu_custom_call.1} parent=1 // pred_check
      _
    $region23: #{tpu_custom_call.1} parent=1 // pred_check_branch
      %602 = sbr.rel (0) target = $region25
    $region24: #{tpu_custom_call.1} parent=1 // pred_region
      %603 = dma.done [#allocation4], 256
    $region25: #{tpu_custom_call.1} parent=1 // pred_fallthru
      _
    %604 = vsyncpa [#allocation3], 1
    %605 = vsyncpa [#allocation6], 1
    %606 = vsyncpa [#allocation4], 1

</llo_original>
